<compile_context>
chip_gen: v7x
topology: tpu7x:2x2x1
jax: 0.10.0
libtpu: 0.0.40
codegen_flags: <defaults>
</compile_context>

<pallas_src>
import jax
import jax.numpy as jnp
from jax import lax
from jax.experimental import pallas as pl
from jax.experimental.pallas import tpu as pltpu


def _attention_kernel(x_ref, w_ref, o_ref):
    # x_ref: (Bblk, N, Dp) bf16 block ; w_ref: (Dp, Dp) bf16 (nn.Linear weight,
    # (out, in) layout) ; o_ref: (Bblk, N, Dp) f32 block.
    Bblk, N, Dp = x_ref.shape
    x = x_ref[...]                       # bf16
    w = w_ref[...]                       # bf16

    # xa = x @ W^T : one hoisted (Bblk*N, Dp) x (Dp, Dp) MXU call contracting
    # the last dim of both operands (no transpose), bf16 in / f32 accumulate.
    xa = lax.dot_general(
        x.reshape(Bblk * N, Dp), w,
        (((1,), (1,)), ((), ())),
        preferred_element_type=jnp.float32,
    ).reshape(Bblk, N, Dp)

    # b = xa @ x^T per batch: contract last dims, bf16 operands, f32 acc.
    b = jnp.einsum("bne,bme->bnm", xa.astype(jnp.bfloat16), x,
                   preferred_element_type=jnp.float32)          # (Bblk, N, N)

    # softmax(b, -1), numerically stable, computed in place in f32.
    b = b - jnp.max(b, axis=-1, keepdims=True)
    b = jnp.exp(b)
    b = b * pl.reciprocal(jnp.sum(b, axis=-1, keepdims=True), approx=False)

    # y = c @ x per batch (bf16 operands, f32 acc); lane-dense (Dp) store.
    y = jnp.einsum("bnm,bmd->bnd", b.astype(jnp.bfloat16), x,
                   preferred_element_type=jnp.float32)          # (Bblk, N, Dp)

    o_ref[...] = y.astype(o_ref.dtype)


def _choose_batch_block(B, N, Dp, budget_bytes, target_steps=8):
    """Largest divisor of B whose per-step footprint fits the VMEM budget and
    that still leaves >= min(B, target_steps) grid steps for pipelining."""
    bytes_per_batch = (
        2 * N * Dp * 2        # x block, bf16, double-buffered
        + 2 * N * Dp * 4      # out block, f32, double-buffered
        + N * Dp * (4 + 2)    # xa (f32) + bf16 copy for the score einsum
        + N * N * (4 + 2)     # scores f32 (in place) + probs bf16
        + N * Dp * 4          # y f32 before the store
    )
    max_bb_vmem = max(1, budget_bytes // bytes_per_batch)
    max_bb_steps = max(1, B // min(B, target_steps))
    bb = int(min(B, max_bb_vmem, max_bb_steps))
    while B % bb:
        bb -= 1
    return bb


def attention_forward(x, w, *, batch_block=None,
                      vmem_limit_bytes=32 * 1024 * 1024):
    """x: (B, N, D) float32, w: (D, D) float32 (nn.Linear weight, no bias).

    Returns (B, N, D) float32, matching the PyTorch module's forward.
    """
    B, N, D = x.shape
    assert w.shape == (D, D)

    # Lane-dense feature dim: zero-pad D to a multiple of 128 (exact — see
    # header comment), and cast MXU operands to bf16 wrapper-side.
    Dp = ((D + 127) // 128) * 128
    if Dp != D:
        x_in = jnp.pad(x, ((0, 0), (0, 0), (0, Dp - D)))
        w_in = jnp.pad(w, ((0, Dp - D), (0, Dp - D)))
    else:
        x_in, w_in = x, w
    x_in = x_in.astype(jnp.bfloat16)
    w_in = w_in.astype(jnp.bfloat16)

    if batch_block is None:
        # Keep block + live intermediates well under the scoped VMEM limit.
        batch_block = _choose_batch_block(B, N, Dp,
                                          budget_bytes=vmem_limit_bytes // 2)
    assert B % batch_block == 0, "batch_block must divide B"
    num_steps = B // batch_block

    cost = pl.CostEstimate(
        flops=2 * B * N * Dp * Dp + 4 * B * N * N * Dp,
        transcendentals=B * N * N,
        bytes_accessed=B * N * Dp * 2 + Dp * Dp * 2 + B * N * Dp * 4,
    )

    y_pad = pl.pallas_call(
        _attention_kernel,
        out_shape=jax.ShapeDtypeStruct((B, N, Dp), x.dtype),
        grid_spec=pl.GridSpec(
            grid=(num_steps,),
            in_specs=[
                # (Bblk, N, Dp) slab of x per step; last two dims are the full
                # (N, Dp) extents -> tile-rule compliant, Dp lane-dense.
                pl.BlockSpec((batch_block, N, Dp), lambda i: (i, 0, 0)),
                # Shared weight, full extent, same block every step.
                pl.BlockSpec((Dp, Dp), lambda i: (0, 0)),
            ],
            out_specs=pl.BlockSpec((batch_block, N, Dp), lambda i: (i, 0, 0)),
        ),
        compiler_params=pltpu.CompilerParams(
            dimension_semantics=("parallel",),
            vmem_limit_bytes=vmem_limit_bytes,
        ),
        cost_estimate=cost,
    )(x_in, w_in)

    return y_pad[..., :D] if Dp != D else y_pad


def attention_reference(x, w, operand_dtype=jnp.float32):
    """Pure-JAX reference. With operand_dtype=f32 this is the exact PyTorch
    math; with bf16 it mirrors the kernel's MXU precision policy."""
    xq = x.astype(operand_dtype)
    wq = w.astype(operand_dtype)
    xa = jnp.einsum("bnd,ed->bne", xq, wq,
                    preferred_element_type=jnp.float32)     # x @ W^T
    b = jnp.einsum("bne,bme->bnm", xa.astype(operand_dtype), xq,
                   preferred_element_type=jnp.float32)      # xa @ x^T
    c = jax.nn.softmax(b, axis=-1)
    return jnp.einsum("bnm,bmd->bnd", c.astype(operand_dtype), xq,
                      preferred_element_type=jnp.float32)   # c @ x


if __name__ == "__main__":
    key = jax.random.PRNGKey(0)
    kx, kw = jax.random.split(key)

    B, N, D = 2, 8, 32
    x = jax.random.normal(kx, (B, N, D), dtype=jnp.float32)
    # Deterministic init mimicking nn.Linear default uniform(-1/sqrt(D), 1/sqrt(D))
    bound = 1.0 / (D ** 0.5)
    w = jax.random.uniform(kw, (D, D), dtype=jnp.float32,
                           minval=-bound, maxval=bound)

    y = jax.block_until_ready(attention_forward(x, w))

    # Tight check vs a reference using the same bf16-operand / f32-accumulate
    # precision policy as the kernel's MXU feeds.
    y_ref_bf16 = attention_reference(x, w, operand_dtype=jnp.bfloat16)
    assert jnp.allclose(y, y_ref_bf16, atol=2e-3, rtol=2e-3), \
        "mismatch vs bf16-operand reference"

    # Loose sanity check vs the exact f32 PyTorch semantics (band covers bf16
    # operand rounding in the three matmuls).
    y_ref_f32 = attention_reference(x, w)
    assert jnp.allclose(y, y_ref_f32, atol=1e-1, rtol=1e-1), \
        "mismatch vs f32 reference"

    print("KERNEL_OK")
</pallas_src>

<mosaic_0001>
module attributes {stable_mosaic.version = 11 : i64} {
  func.func @_attention_kernel(%arg0: i32, %arg1: memref<1x8x128xbf16, #tpu.memory_space<vmem>>, %arg2: memref<128x128xbf16, #tpu.memory_space<vmem>>, %arg3: memref<1x8x128xf32, #tpu.memory_space<vmem>>) attributes {dimension_semantics = [#tpu.dimension_semantics<parallel>], iteration_bounds = array<i64: 2>, scalar_prefetch = 0 : i64, scratch_operands = 0 : i64, tpu.core_type = #tpu.core_type<tc>, window_params = [{transform_indices = @transform_0, window_bounds = array<i64: 1, 8, 128>}, {pipeline_mode = #tpu.pipeline_mode<synchronous>, transform_indices = @transform_1, window_bounds = array<i64: 128, 128>}, {transform_indices = @transform_2, window_bounds = array<i64: 1, 8, 128>}]} {
    %c0 = arith.constant 0 : index
    %c0_0 = arith.constant 0 : index
    %c0_1 = arith.constant 0 : index
    %0 = vector.load %arg1[%c0, %c0_0, %c0_1] : memref<1x8x128xbf16, #tpu.memory_space<vmem>>, vector<1x8x128xbf16>
    %c0_2 = arith.constant 0 : index
    %c0_3 = arith.constant 0 : index
    %1 = vector.load %arg2[%c0_2, %c0_3] : memref<128x128xbf16, #tpu.memory_space<vmem>>, vector<128x128xbf16>
    %2 = vector.shape_cast %0 : vector<1x8x128xbf16> to vector<8x128xbf16>
    %cst = arith.constant dense<0.000000e+00> : vector<8x128xf32>
    %3 = tpu.matmul %2, %1, %cst {dimension_numbers = #tpu.dot_dimension_numbers<[1], [1], [0], [0], [0, 0, 1, 0], [], []>} : vector<8x128xbf16>, vector<128x128xbf16>, vector<8x128xf32> -> vector<8x128xf32>
    %4 = vector.shape_cast %3 : vector<8x128xf32> to vector<1x8x128xf32>
    %5 = arith.truncf %4 : vector<1x8x128xf32> to vector<1x8x128xbf16>
    "tpu.trace_start"() <{level = 10 : i32, message = "bne,bme->bnm"}> : () -> ()
    %cst_4 = arith.constant dense<0.000000e+00> : vector<1x8x8xf32>
    %6 = tpu.matmul %5, %0, %cst_4 {dimension_numbers = #tpu.dot_dimension_numbers<[2], [2], [1], [1], [0, 0, 0, 1, 1, 1], [0], [0]>} : vector<1x8x128xbf16>, vector<1x8x128xbf16>, vector<1x8x8xf32> -> vector<1x8x8xf32>
    "tpu.trace_stop"() : () -> ()
    %cst_5 = arith.constant dense<0xFF800000> : vector<1x8xf32>
    %7 = vector.multi_reduction <maximumf>, %6, %cst_5 [2] : vector<1x8x8xf32> to vector<1x8xf32>
    %8 = vector.shape_cast %7 : vector<1x8xf32> to vector<1x8x1xf32>
    %9 = vector.broadcast %8 : vector<1x8x1xf32> to vector<1x8x8xf32>
    %10 = arith.subf %6, %9 : vector<1x8x8xf32>
    %11 = math.exp %10 : vector<1x8x8xf32>
    %cst_6 = arith.constant dense<0.000000e+00> : vector<1x8xf32>
    %12 = vector.multi_reduction <add>, %11, %cst_6 [2] : vector<1x8x8xf32> to vector<1x8xf32>
    %13 = vector.shape_cast %12 : vector<1x8xf32> to vector<1x8x1xf32>
    %14 = tpu.reciprocal %13 : vector<1x8x1xf32> -> vector<1x8x1xf32>
    %15 = vector.broadcast %14 : vector<1x8x1xf32> to vector<1x8x8xf32>
    %16 = arith.mulf %11, %15 : vector<1x8x8xf32>
    %17 = arith.truncf %16 : vector<1x8x8xf32> to vector<1x8x8xbf16>
    "tpu.trace_start"() <{level = 10 : i32, message = "bnm,bmd->bnd"}> : () -> ()
    %cst_7 = arith.constant dense<0.000000e+00> : vector<1x8x128xf32>
    %18 = tpu.matmul %17, %0, %cst_7 {dimension_numbers = #tpu.dot_dimension_numbers<[2], [1], [1], [2], [0, 0, 0, 1, 1, 2], [0], [0]>} : vector<1x8x8xbf16>, vector<1x8x128xbf16>, vector<1x8x128xf32> -> vector<1x8x128xf32>
    "tpu.trace_stop"() : () -> ()
    %c0_8 = arith.constant 0 : index
    %c0_9 = arith.constant 0 : index
    %c0_10 = arith.constant 0 : index
    %19 = vector.load %arg3[%c0_8, %c0_9, %c0_10] : memref<1x8x128xf32, #tpu.memory_space<vmem>>, vector<1x8x128xf32>
    tpu.vector_store %arg3[%c0_8, %c0_9, %c0_10], %18 {strides = array<i32>} : memref<1x8x128xf32, #tpu.memory_space<vmem>>, vector<1x8x128xf32>,
    return
  }
  func.func @transform_0(%arg0: i32) -> (i32, i32, i32) {
    %c0_i32 = arith.constant 0 : i32
    %c0_i32_0 = arith.constant 0 : i32
    %c0_i32_1 = arith.constant 0 : i32
    return %arg0, %c0_i32, %c0_i32_0 : i32, i32, i32
  }
  func.func @transform_1(%arg0: i32) -> (i32, i32) {
    %c0_i32 = arith.constant 0 : i32
    %c0_i32_0 = arith.constant 0 : i32
    %c0_i32_1 = arith.constant 0 : i32
    return %c0_i32, %c0_i32_0 : i32, i32
  }
  func.func @transform_2(%arg0: i32) -> (i32, i32, i32) {
    %c0_i32 = arith.constant 0 : i32
    %c0_i32_0 = arith.constant 0 : i32
    %c0_i32_1 = arith.constant 0 : i32
    return %arg0, %c0_i32, %c0_i32_0 : i32, i32, i32
  }
}

</mosaic_0001>

<llo_original>
// kernel: tpu_custom_call.1
$region0: #{tpu_custom_call.1}
  #allocation0 [shape = 'u32[]', space=smem, size = 0x4, offset = 0x4, fixed_abs, tag = 'smem constant byte address 0x4 - core index']
  #allocation1 [shape = 'u32[144,128]{1,0:T(1,128)}', space=vmem, size = 0x12000, scoped, tag = 'internal scratch']
  %s0 = inlined_call_operand.hbm [shape: bf16[2,8,128], index: 0, kind: input, shape index: {}]
  %s1 = inlined_call_operand.hbm [shape: bf16[128,128], index: 1, kind: input, shape index: {}]
  %s2 = inlined_call_operand.hbm [shape: f32[2,8,128], index: 2, kind: output, shape index: {}]
  %s3 = sld [smem:[#allocation0]]
  $region49: #{tpu_custom_call.1} parent=0
    _
  %s5 = ssub.s32 1, %s3
  %s6 = scalar_select 0, %s5, %s3
  $region1: #{tpu_custom_call.1} parent=0
    #allocation2 [shape = 'u8[4096]{0}', space=vmem, size = 0x1000, scoped, tag = 'input window, operand 0']
    #allocation3 [shape = 's32[2]{0}', space=sflag, size = 0x8, scoped, tag = 'scoped memory for tpu_custom_call.1']
    #allocation4 [shape = 's32[2]{0}', space=sflag, size = 0x8, scoped, tag = 'scoped memory for tpu_custom_call.1']
    #allocation5 [shape = 'u8[32768]{0}', space=vmem, size = 0x8000, scoped, tag = 'input window, operand 1, single buffered']
    #allocation6 [shape = 's32[1]{0}', space=sflag, size = 0x4, scoped, tag = 'scoped memory for tpu_custom_call.1']
    #allocation7 [shape = 'u8[8192]{0}', space=vmem, size = 0x2000, scoped, tag = 'output window, operand 0']
    %7 = vsyncpa [#allocation3], 0
    %s8 = scalar_lea.sflag [#allocation3], 1
    %9 = vsyncpa %s8, 0
    %10 = vsyncpa [#allocation6], 0
    %11 = vsyncpa [#allocation4], 0
    %s12 = scalar_lea.sflag [#allocation4], 1
    %13 = vsyncpa %s12, 0
    loop: start=0, step=1, limit=4
    $region2: #{tpu_custom_call.1} parent=1 // loop_pre_header
      _
    $region3: #{tpu_custom_call.1} parent=1 // loop_header
      %s15 = sphi 0, %s19
      %p16 = scmp.ge.s32.totalorder %s15, 4
      %s25 = sphi 0, %s27
      %s28 = sphi 0, %s25
      %s29 = sphi 0, %s28
      %s45 = sphi 0, %s29
      %s49 = sphi 0, %s49
      %s51 = sphi 0, %s49
      %s52 = sphi 0, %s51
      %s66 = sphi 0, %s52
      %s72 = sphi 0, %s74
      %s75 = sphi 0, %s72
      %s76 = sphi 0, %s75
      %s92 = sphi 0, %s76
    $region4: #{tpu_custom_call.1} parent=1 // loop_header_branch
      %18 = sbr.rel (%p16) target = $region8
    $region5: #{tpu_custom_call.1} parent=1 // loop_body
      %s20 = ssub.s32 %s15, 1
      %s21 = ssub.s32 %s15, 2
      %s22 = sadd.s32 %s15, 1
      %s23 = ssub.s32 %s15, %s22
      %p24 = scmp.eq.s32.totalorder %s23, 0
      %s26 = sadd.s32 %s25, 1
      %s27 = scalar_select %p24, %s25, %s26
      %p30 = pneg %p24
      %p31 = scmp.eq.s32.totalorder %s15, 1
      %p32 = por %p30, %p31
      %p33 = scmp.ne.s32.totalorder %s25, %s28
      %p34 = scmp.eq.s32.totalorder %s15, 0
      %p35 = por %p33, %p34
      %p36 = scmp.ne.s32.totalorder %s25, %s28
      %p37 = scmp.eq.s32.totalorder %s20, 1
      %p38 = por %p36, %p37
      %p39 = scmp.ne.s32.totalorder %s28, %s29
      %p40 = scmp.eq.s32.totalorder %s20, 0
      %p41 = por %p39, %p40
      %p42 = scmp.ne.s32.totalorder %s28, %s29
      %p43 = scmp.eq.s32.totalorder %s21, 1
      %p44 = por %p42, %p43
      %p46 = scmp.ne.s32.totalorder %s29, %s45
      %p47 = scmp.eq.s32.totalorder %s21, 0
      %p48 = por %p46, %p47
      %s50 = sadd.s32 %s49, 1
      %p53 = scmp.eq.s32.totalorder %s15, 1
      %p54 = scmp.ne.s32.totalorder %s49, %s51
      %p55 = scmp.eq.s32.totalorder %s15, 0
      %p56 = por %p54, %p55
      %p57 = scmp.ne.s32.totalorder %s49, %s51
      %p58 = scmp.eq.s32.totalorder %s20, 1
      %p59 = por %p57, %p58
      %p60 = scmp.ne.s32.totalorder %s51, %s52
      %p61 = scmp.eq.s32.totalorder %s20, 0
      %p62 = por %p60, %p61
      %p63 = scmp.ne.s32.totalorder %s51, %s52
      %p64 = scmp.eq.s32.totalorder %s21, 1
      %p65 = por %p63, %p64
      %p67 = scmp.ne.s32.totalorder %s52, %s66
      %p68 = scmp.eq.s32.totalorder %s21, 0
      %p69 = por %p67, %p68
      %s70 = ssub.s32 %s15, %s22
      %p71 = scmp.eq.s32.totalorder %s70, 0
      %s73 = sadd.s32 %s72, 1
      %s74 = scalar_select %p71, %s72, %s73
      %p77 = pneg %p71
      %p78 = scmp.eq.s32.totalorder %s15, 1
      %p79 = por %p77, %p78
      %p80 = scmp.ne.s32.totalorder %s72, %s75
      %p81 = scmp.eq.s32.totalorder %s15, 0
      %p82 = por %p80, %p81
      %p83 = scmp.ne.s32.totalorder %s72, %s75
      %p84 = scmp.eq.s32.totalorder %s20, 1
      %p85 = por %p83, %p84
      %p86 = scmp.ne.s32.totalorder %s75, %s76
      %p87 = scmp.eq.s32.totalorder %s20, 0
      %p88 = por %p86, %p87
      %p89 = scmp.ne.s32.totalorder %s75, %s76
      %p90 = scmp.eq.s32.totalorder %s21, 1
      %p91 = por %p89, %p90
      %p93 = scmp.ne.s32.totalorder %s76, %s92
      %p94 = scmp.eq.s32.totalorder %s21, 0
      %p95 = por %p93, %p94
      %p96 = scmp.le.s32.totalorder 1, %s15
      %p97 = scmp.lt.s32.totalorder %s15, 3
      %p98 = pnand %p96, %p97
      %p99 = pneg %p98
      // Predicated region
      $region9: #{tpu_custom_call.1} parent=5 // pred_check
        _
      $region10: #{tpu_custom_call.1} parent=5 // pred_check_branch
        %101 = sbr.rel (%p98) target = $region12
      $region11: #{tpu_custom_call.1} parent=5 // pred_region
        %s102 = ssub.s32 %s15, 1
        // Predicated region
        $region13: #{tpu_custom_call.1} parent=11 // pred_check
          %p103 = pneg %p62
        $region14: #{tpu_custom_call.1} parent=11 // pred_check_branch
          %105 = sbr.rel (%p103) target = $region16
        $region15: #{tpu_custom_call.1} parent=11 // pred_region
          %s107 = ssub.s32 1024, 1024
          %108 = vsyncadd [#allocation6], %s107
          %s109 = sshll.u32 [#allocation5], 4
          %s110 = int_to_ptr.vmem [resolvable:$true] %s109
          %115 = dma.hbm_to_vmem [thread:$0]  %s1, 1024, %s110, [#allocation6], 64, 64, 4
        $region16: #{tpu_custom_call.1} parent=11 // pred_fallthru
          _
      $region12: #{tpu_custom_call.1} parent=5 // pred_fallthru
        _
      %p116 = scmp.lt.s32.totalorder %s15, 2
      // Predicated region
      $region17: #{tpu_custom_call.1} parent=5 // pred_check
        %p117 = pneg %p116
      $region18: #{tpu_custom_call.1} parent=5 // pred_check_branch
        %119 = sbr.rel (%p117) target = $region20
      $region19: #{tpu_custom_call.1} parent=5 // pred_region
        // Predicated region
        $region21: #{tpu_custom_call.1} parent=19 // pred_check
          %p120 = pneg %p35
        $region22: #{tpu_custom_call.1} parent=19 // pred_check_branch
          %122 = sbr.rel (%p120) target = $region24
        $region23: #{tpu_custom_call.1} parent=19 // pred_region
          %s123 = sand.u32 %s25, 1
          %s124 = scalar_lea.sflag [#allocation3], %s123
          %s125 = sand.u32 %s25, 1
          %s126 = smul.addr %s125, 4
          %s127 = scalar_lea.vmem [#allocation2], %s126
          %s129 = ssub.s32 64, 64
          %130 = vsyncadd %s124, %s129
          %s131 = smul.addr %s15, 64
          %s132 = scalar_lea.hbm %s0, %s131
          %s134 = sshll.u32 %s127, 4
          %s135 = int_to_ptr.vmem [resolvable:$true] %s134
          %137 = dma.hbm_to_vmem [thread:$0]  %s132, 64, %s135, %s124
        $region24: #{tpu_custom_call.1} parent=19 // pred_fallthru
          _
      $region20: #{tpu_custom_call.1} parent=5 // pred_fallthru
        _
      %p138 = scmp.le.s32.totalorder 1, %s15
      %p139 = scmp.lt.s32.totalorder %s15, 3
      %p140 = pnand %p138, %p139
      %p141 = pneg %p140
      // Predicated region
      $region25: #{tpu_custom_call.1} parent=5 // pred_check
        _
      $region26: #{tpu_custom_call.1} parent=5 // pred_check_branch
        %143 = sbr.rel (%p140) target = $region28
      $region27: #{tpu_custom_call.1} parent=5 // pred_region
        %s144 = ssub.s32 %s15, 1
        %s145 = sand.u32 %s28, 1
        %s146 = scalar_lea.sflag [#allocation3], %s145
        %s147 = sand.u32 %s28, 1
        %s148 = smul.addr %s147, 4
        %s149 = scalar_lea.vmem [#allocation2], %s148
        // Predicated region
        $region29: #{tpu_custom_call.1} parent=27 // pred_check
          %p150 = pneg %p41
        $region30: #{tpu_custom_call.1} parent=27 // pred_check_branch
          %152 = sbr.rel (%p150) target = $region32
        $region31: #{tpu_custom_call.1} parent=27 // pred_region
          %153 = dma.done %s146, 64
        $region32: #{tpu_custom_call.1} parent=27 // pred_fallthru
          _
        // Predicated region
        $region33: #{tpu_custom_call.1} parent=27 // pred_check
          %p154 = pneg %p62
        $region34: #{tpu_custom_call.1} parent=27 // pred_check_branch
          %156 = sbr.rel (%p154) target = $region36
        $region35: #{tpu_custom_call.1} parent=27 // pred_region
          %157 = dma.done [#allocation6], 1024
        $region36: #{tpu_custom_call.1} parent=27 // pred_fallthru
          _
        %s158 = sand.u32 %s28, 1
        %s159 = scalar_lea.sflag [#allocation3], %s158
        %s160 = sand.u32 %s28, 1
        %s161 = smul.addr %s160, 4
        %s162 = scalar_lea.vmem [#allocation2], %s161
        %p163 = pneg %p41
        %p164 = pneg %p38
        %p165 = pneg %p62
        %p166 = pneg %p59
        %p167 = pneg %p88
        %p168 = pneg %p85
        %s169 = sand.u32 %s75, 1
        %s170 = scalar_lea.sflag [#allocation4], %s169
        %s171 = sand.u32 %s75, 1
        %s172 = smul.addr %s171, 8
        %s173 = scalar_lea.vmem [#allocation7], %s172
        %v175 = vld [vmem:[%s149] sm:$0xf]
        %v176 = vld [vmem:[#allocation5] sm:$0xf]
        %v177 = vld [vmem:[#allocation5 + $0x4] sm:$0xf]
        %v178 = vld [vmem:[#allocation5 + $0x8] sm:$0xf]
        %v179 = vld [vmem:[#allocation5 + $0xc] sm:$0xf]
        %v180 = vld [vmem:[#allocation5 + $0x10] sm:$0xf]
        %v181 = vld [vmem:[#allocation5 + $0x14] sm:$0xf]
        %v182 = vld [vmem:[#allocation5 + $0x18] sm:$0xf]
        %v183 = vld [vmem:[#allocation5 + $0x1c] sm:$0xf]
        %v184 = vld [vmem:[#allocation5 + $0x20] sm:$0xf]
        %v185 = vld [vmem:[#allocation5 + $0x24] sm:$0xf]
        %v186 = vld [vmem:[#allocation5 + $0x28] sm:$0xf]
        %v187 = vld [vmem:[#allocation5 + $0x2c] sm:$0xf]
        %v188 = vld [vmem:[#allocation5 + $0x30] sm:$0xf]
        %v189 = vld [vmem:[#allocation5 + $0x34] sm:$0xf]
        %v190 = vld [vmem:[#allocation5 + $0x38] sm:$0xf]
        %v191 = vld [vmem:[#allocation5 + $0x3c] sm:$0xf]
        %v208 = vunpack.c.l.b16 %v176
        %v209 = vunpack.c.l.b16 %v177
        %v210 = vunpack.c.l.b16 %v178
        %v211 = vunpack.c.l.b16 %v179
        %v212 = vunpack.c.l.b16 %v180
        %v213 = vunpack.c.l.b16 %v181
        %v214 = vunpack.c.l.b16 %v182
        %v215 = vunpack.c.l.b16 %v183
        %v216 = vunpack.c.l.b16 %v184
        %v217 = vunpack.c.l.b16 %v185
        %v218 = vunpack.c.l.b16 %v186
        %v219 = vunpack.c.l.b16 %v187
        %v220 = vunpack.c.l.b16 %v188
        %v221 = vunpack.c.l.b16 %v189
        %v222 = vunpack.c.l.b16 %v190
        %v223 = vunpack.c.l.b16 %v191
        %v224 = vpack.c.b16 %v209, %v208
        %v225 = vpack.c.b16 %v211, %v210
        %v226 = vpack.c.b16 %v213, %v212
        %v227 = vpack.c.b16 %v215, %v214
        %v228 = vpack.c.b16 %v217, %v216
        %v229 = vpack.c.b16 %v219, %v218
        %v230 = vpack.c.b16 %v221, %v220
        %v231 = vpack.c.b16 %v223, %v222
        %240 = vmatprep.subr.bf16.mxu0 0
        %241 = vmatpush1.bf16.xpose.msra.mxu0 %v224
        %242 = vmatprep.subr.bf16.mxu0 0
        %243 = vmatpush1.bf16.xpose.msra.mxu0 %v225
        %244 = vmatprep.subr.bf16.mxu0 0
        %245 = vmatpush1.bf16.xpose.msra.mxu0 %v226
        %246 = vmatprep.subr.bf16.mxu0 0
        %247 = vmatpush1.bf16.xpose.msra.mxu0 %v227
        %248 = vmatprep.subr.bf16.mxu0 0
        %249 = vmatpush1.bf16.xpose.msra.mxu0 %v228
        %250 = vmatprep.subr.bf16.mxu0 0
        %251 = vmatpush1.bf16.xpose.msra.mxu0 %v229
        %252 = vmatprep.subr.bf16.mxu0 0
        %253 = vmatpush1.bf16.xpose.msra.mxu0 %v230
        %254 = vmatprep.subr.bf16.mxu0 0
        %255 = vmatpush1.bf16.xpose.msra.mxu0 %v231
        %256 = vmatprep.subr.bf16.mxu0 0
        %257 = vmatpush1.bf16.xpose.msra.mxu0 0
        %258 = vmatprep.subr.bf16.mxu0 0
        %259 = vmatpush1.bf16.xpose.msra.mxu0 0
        %260 = vmatprep.subr.bf16.mxu0 0
        %261 = vmatpush1.bf16.xpose.msra.mxu0 0
        %262 = vmatprep.subr.bf16.mxu0 0
        %263 = vmatpush1.bf16.xpose.msra.mxu0 0
        %264 = vmatprep.subr.bf16.mxu0 0
        %265 = vmatpush1.bf16.xpose.msra.mxu0 0
        %266 = vmatprep.subr.bf16.mxu0 0
        %267 = vmatpush1.bf16.xpose.msra.mxu0 0
        %268 = vmatprep.subr.bf16.mxu0 0
        %269 = vmatpush1.bf16.xpose.msra.mxu0 0
        %270 = vmatprep.subr.bf16.mxu0 0
        %271 = vmatpush1.bf16.xpose.msra.mxu0 0
        %272 = vmatprep.mubr.bf16.mxu0 0
        %273 = vmatmul.mubr.bf16.gmra.mrb[0].mxu0 %v175
        %v274 = vpop.f32.mrb[0].mxu0
        %v275 = vadd.f32 0.0, %v274
        %v276 = vpop.f32.mrb[0].mxu0
        %v277 = vpop.f32.mrb[0].mxu0
        %v278 = vpop.f32.mrb[0].mxu0
        %279 = vdwg.mxu0
        %v280 = vpack.c.bf16 %v275, %v275
        %281 = vmatprep.subr.bf16.mxu0 0
        %282 = vmatpush1.bf16.xpose.msra.mxu0 %v175
        %283 = vmatprep.subr.bf16.mxu0 0
        %284 = vmatpush1.bf16.xpose.msra.mxu0 0
        %285 = vmatprep.subr.bf16.mxu0 0
        %286 = vmatpush1.bf16.xpose.msra.mxu0 0
        %287 = vmatprep.subr.bf16.mxu0 0
        %288 = vmatpush1.bf16.xpose.msra.mxu0 0
        %289 = vmatprep.subr.bf16.mxu0 0
        %290 = vmatpush1.bf16.xpose.msra.mxu0 0
        %291 = vmatprep.subr.bf16.mxu0 0
        %292 = vmatpush1.bf16.xpose.msra.mxu0 0
        %293 = vmatprep.subr.bf16.mxu0 0
        %294 = vmatpush1.bf16.xpose.msra.mxu0 0
        %295 = vmatprep.subr.bf16.mxu0 0
        %296 = vmatpush1.bf16.xpose.msra.mxu0 0
        %297 = vmatprep.subr.bf16.mxu0 0
        %298 = vmatpush1.bf16.xpose.msra.mxu0 0
        %299 = vmatprep.subr.bf16.mxu0 0
        %300 = vmatpush1.bf16.xpose.msra.mxu0 0
        %301 = vmatprep.subr.bf16.mxu0 0
        %302 = vmatpush1.bf16.xpose.msra.mxu0 0
        %303 = vmatprep.subr.bf16.mxu0 0
        %304 = vmatpush1.bf16.xpose.msra.mxu0 0
        %305 = vmatprep.subr.bf16.mxu0 0
        %306 = vmatpush1.bf16.xpose.msra.mxu0 0
        %307 = vmatprep.subr.bf16.mxu0 0
        %308 = vmatpush1.bf16.xpose.msra.mxu0 0
        %309 = vmatprep.subr.bf16.mxu0 0
        %310 = vmatpush1.bf16.xpose.msra.mxu0 0
        %311 = vmatprep.subr.bf16.mxu0 0
        %312 = vmatpush1.bf16.xpose.msra.mxu0 0
        %313 = vmatprep.mubr.bf16.mxu0 0
        %314 = vmatmul.mubr.bf16.gmra.mrb[0].mxu0 %v280
        %v315 = vpop.f32.mrb[0].mxu0
        %v316 = vadd.f32 0.0, %v315
        %v317 = vpop.f32.mrb[0].mxu0
        %v318 = vpop.f32.mrb[0].mxu0
        %v319 = vpop.f32.mrb[0].mxu0
        %320 = vdwg.mxu0
        %vm321 = vcmask 64512
        %v322 = vsel %vm321, %v316, -inf
        %323 = vmax.xlane.f32.xlu0 %v322
        %v324 = vpop.xlane.xlu0 %323
        %v325 = vsub.f32 %v316, %v324
        %v326 = vmul.f32 %v325, 1.442695
        %v327 = vpow.pop %v326
        %v328 = vsel %vm321, %v327, 0.0
        %329 = vadd.xlane.f32.xlu0 %v328
        %v330 = vpop.xlane.xlu0 %329
        %v331 = vrcp.pop %v330
        %v332 = vmul.f32 %v327, %v331
        %v333 = vpack.c.bf16 %v332, %v332
        %v335 = vsel %vm321, %v333, 0
        %vm337 = vcmask 1043456
        %v339 = vsel %vm337, %v175, 0
        %341 = vmatprep.subr.bf16.mxu0 0
        %342 = vmatpush1.bf16.msra.mxu0 %v339
        %343 = vmatprep.subr.bf16.mxu0 0
        %344 = vmatpush1.bf16.msra.mxu0 0
        %345 = vmatprep.subr.bf16.mxu0 0
        %346 = vmatpush1.bf16.msra.mxu0 0
        %347 = vmatprep.subr.bf16.mxu0 0
        %348 = vmatpush1.bf16.msra.mxu0 0
        %349 = vmatprep.subr.bf16.mxu0 0
        %350 = vmatpush1.bf16.msra.mxu0 0
        %351 = vmatprep.subr.bf16.mxu0 0
        %352 = vmatpush1.bf16.msra.mxu0 0
        %353 = vmatprep.subr.bf16.mxu0 0
        %354 = vmatpush1.bf16.msra.mxu0 0
        %355 = vmatprep.subr.bf16.mxu0 0
        %356 = vmatpush1.bf16.msra.mxu0 0
        %357 = vmatprep.subr.bf16.mxu0 0
        %358 = vmatpush1.bf16.msra.mxu0 0
        %359 = vmatprep.subr.bf16.mxu0 0
        %360 = vmatpush1.bf16.msra.mxu0 0
        %361 = vmatprep.subr.bf16.mxu0 0
        %362 = vmatpush1.bf16.msra.mxu0 0
        %363 = vmatprep.subr.bf16.mxu0 0
        %364 = vmatpush1.bf16.msra.mxu0 0
        %365 = vmatprep.subr.bf16.mxu0 0
        %366 = vmatpush1.bf16.msra.mxu0 0
        %367 = vmatprep.subr.bf16.mxu0 0
        %368 = vmatpush1.bf16.msra.mxu0 0
        %369 = vmatprep.subr.bf16.mxu0 0
        %370 = vmatpush1.bf16.msra.mxu0 0
        %371 = vmatprep.subr.bf16.mxu0 0
        %372 = vmatpush1.bf16.msra.mxu0 0
        %373 = vmatprep.mubr.bf16.mxu0 0
        %374 = vmatmul.mubr.bf16.gmra.mrb[0].mxu0 %v335
        %v375 = vpop.f32.mrb[0].mxu0
        %v376 = vadd.f32 0.0, %v375
        %v377 = vpop.f32.mrb[0].mxu0
        %v378 = vpop.f32.mrb[0].mxu0
        %v379 = vpop.f32.mrb[0].mxu0
        %380 = vdwg.mxu0
        %381 = vst [vmem:[%s173] sm:$0xff] %v376
        %s382 = sand.u32 %s75, 1
        %s383 = scalar_lea.sflag [#allocation4], %s382
        %s384 = sand.u32 %s75, 1
        %s385 = smul.addr %s384, 8
        %s386 = scalar_lea.vmem [#allocation7], %s385
        // Predicated region
        $region37: #{tpu_custom_call.1} parent=27 // pred_check
          %p387 = pneg %p85
        $region38: #{tpu_custom_call.1} parent=27 // pred_check_branch
          %389 = sbr.rel (%p387) target = $region40
        $region39: #{tpu_custom_call.1} parent=27 // pred_region
          %s391 = ssub.s32 128, 128
          %392 = vsyncadd %s383, %s391
          %s393 = smul.addr %s20, 128
          %s394 = scalar_lea.hbm %s2, %s393
          %s396 = sshll.u32 %s386, 4
          %s397 = int_to_ptr.vmem [resolvable:$true] %s396
          %399 = dma.vmem_to_hbm [thread:$0]  %s397, 128, %s394, %s383
        $region40: #{tpu_custom_call.1} parent=27 // pred_fallthru
          _
      $region28: #{tpu_custom_call.1} parent=5 // pred_fallthru
        _
      %p400 = scmp.le.s32.totalorder 2, %s15
      // Predicated region
      $region41: #{tpu_custom_call.1} parent=5 // pred_check
        %p401 = pneg %p400
      $region42: #{tpu_custom_call.1} parent=5 // pred_check_branch
        %403 = sbr.rel (%p401) target = $region44
      $region43: #{tpu_custom_call.1} parent=5 // pred_region
        %s404 = ssub.s32 %s15, 2
        // Predicated region
        $region45: #{tpu_custom_call.1} parent=43 // pred_check
          %p405 = pneg %p91
        $region46: #{tpu_custom_call.1} parent=43 // pred_check_branch
          %407 = sbr.rel (%p405) target = $region48
        $region47: #{tpu_custom_call.1} parent=43 // pred_region
          %s408 = sand.u32 %s76, 1
          %s409 = scalar_lea.sflag [#allocation4], %s408
          %s410 = sand.u32 %s76, 1
          %s411 = smul.addr %s410, 8
          %s412 = scalar_lea.vmem [#allocation7], %s411
          %413 = dma.done %s409, 128
        $region48: #{tpu_custom_call.1} parent=43 // pred_fallthru
          _
      $region44: #{tpu_custom_call.1} parent=5 // pred_fallthru
        _
    $region6: #{tpu_custom_call.1} parent=1 // loop_footer
      %s19 = sadd.s32 1, %s15
    $region7: #{tpu_custom_call.1} parent=1 // loop_footer_branch
      %14 = sbr.rel target = $region3
    $region8: #{tpu_custom_call.1} parent=1 // loop_exit
      _
    %414 = vsyncpa [#allocation3], 1
    %s415 = scalar_lea.sflag [#allocation3], 1
    %416 = vsyncpa %s415, 1
    %417 = vsyncpa [#allocation6], 1
    %418 = vsyncpa [#allocation4], 1
    %s419 = scalar_lea.sflag [#allocation4], 1
    %420 = vsyncpa %s419, 1

</llo_original>
